<compile_context>
chip_gen: v5e
topology: v5e:2x2
jax: 0.10.0
libtpu: 0.0.40
codegen_flags: <defaults>
</compile_context>

<pallas_src>
import jax
import jax.numpy as jnp
from jax.experimental import pallas as pl
from jax.experimental.pallas import tpu as pltpu


# ----------------------------------------------------------------------------
# Kernels
# ----------------------------------------------------------------------------
def ffn_resident_kernel(x_ref, w1_ref, b1_ref, w2_ref, b2_ref, o_ref):
    # x_ref:  (tm, d_model)          token tile
    # w1_ref: (d_model, d_ff_pad)    full W1 (VMEM resident, constant index_map)
    # b1_ref: (1, d_ff_pad)  f32
    # w2_ref: (d_ff_pad, d_model)    full W2 (VMEM resident)
    # b2_ref: (1, d_model)   f32
    # o_ref:  (tm, d_model)
    h = jnp.dot(x_ref[...], w1_ref[...], preferred_element_type=jnp.float32)
    h = jnp.maximum(h + b1_ref[...], 0.0)
    # TODO(synk): dropout on `h` (training mode) not implemented; inference identity.
    out = jnp.dot(h.astype(w2_ref.dtype), w2_ref[...],
                  preferred_element_type=jnp.float32)
    o_ref[...] = (out + b2_ref[...]).astype(o_ref.dtype)


def ffn_stream_kernel(x_ref, w1_ref, b1_ref, w2_ref, b2_ref, o_ref, acc_ref):
    # x_ref:  (tm, d_model)      token tile
    # w1_ref: (d_model, tf)      chunk of W1 columns
    # b1_ref: (1, tf)   f32      chunk of b1
    # w2_ref: (tf, d_model)      chunk of W2 rows
    # b2_ref: (1, d_model) f32   full b2
    # o_ref:  (tm, d_model)      output tile
    # acc_ref:(tm, d_model) f32  VMEM accumulator (persists across ff chunks)
    f = pl.program_id(1)

    @pl.when(f == 0)
    def _init():
        # Fold the output bias into the accumulator init: direct broadcast write,
        # no materialized zero tile, no wasted VPU add.
        acc_ref[...] = jnp.broadcast_to(b2_ref[...], acc_ref.shape)

    h = jnp.dot(x_ref[...], w1_ref[...], preferred_element_type=jnp.float32)
    h = jnp.maximum(h + b1_ref[...], 0.0)
    # TODO(synk): dropout on `h` (training mode) not implemented; inference identity.

    acc_ref[...] += jnp.dot(h.astype(w2_ref.dtype), w2_ref[...],
                            preferred_element_type=jnp.float32)

    @pl.when(f == pl.num_programs(1) - 1)
    def _store():
        o_ref[...] = acc_ref[...].astype(o_ref.dtype)


# ----------------------------------------------------------------------------
# Wrapper
# ----------------------------------------------------------------------------
def _round_up(x, m):
    return ((x + m - 1) // m) * m


def _tpu_gen_params():
    """Generation-aware defaults: VMEM budget, MXU alignment, tm/tf defaults, #TC."""
    try:
        kind = jax.devices()[0].device_kind.lower()
    except Exception:
        kind = ""
    if "v7" in kind:
        # 64 MiB physical VMEM per TC -> leave headroom; 2 TCs per chip.
        return dict(vmem_limit=52 * 1024 * 1024, align=256, tm=512, tf=2048, n_tc=2)
    if "v6" in kind:
        return dict(vmem_limit=100 * 1024 * 1024, align=256, tm=1024, tf=2048, n_tc=1)
    if "v5" in kind:
        return dict(vmem_limit=100 * 1024 * 1024, align=128, tm=512, tf=2048, n_tc=1)
    # Unknown part: conservative defaults.
    return dict(vmem_limit=64 * 1024 * 1024, align=128, tm=512, tf=1024, n_tc=1)


def positionwise_feed_forward(x, w1, b1, w2, b2, *, tm=None, tf=None,
                              weights_resident=None, out_dtype=None,
                              vmem_limit_bytes=None):
    """x: (..., d_model). w1: (d_model, d_ff), w2: (d_ff, d_model). Returns x.shape."""
    gen = _tpu_gen_params()
    if vmem_limit_bytes is None:
        vmem_limit_bytes = gen["vmem_limit"]
    if tm is None:
        tm = gen["tm"]
    if tf is None:
        tf = gen["tf"]

    orig_shape = x.shape
    d_model = orig_shape[-1]
    d_ff = w1.shape[1]
    if out_dtype is None:
        out_dtype = x.dtype

    x2d = x.reshape(-1, d_model)
    M = x2d.shape[0]

    # --- Row tile: MXU-aligned when M is large, minimally padded when small. ---
    row_align = gen["align"] if M >= gen["align"] else 8
    tm = _round_up(max(8, tm), 8)
    tm = min(tm, _round_up(M, row_align))
    # On multi-TC parts keep >= 2 token tiles so the "parallel" axis can split
    # across TensorCores.
    if gen["n_tc"] >= 2 and M > tm and _round_up(M, tm) // tm < 2:
        tm = max(row_align, _round_up(-(-M // 2), row_align))
    M_pad = _round_up(M, tm)
    if M_pad != M:
        x2d = jnp.pad(x2d, ((0, M_pad - M), (0, 0)))

    w_itemsize = jnp.dtype(w1.dtype).itemsize
    x_itemsize = jnp.dtype(x2d.dtype).itemsize
    o_itemsize = jnp.dtype(out_dtype).itemsize

    # --- Decide weight residency against the VMEM budget (conservative 2x on
    #     weights for pipeline buffering, plus tiles and the f32 intermediate). ---
    dff_128 = _round_up(d_ff, 128)
    w_bytes = (d_model * dff_128 + dff_128 * d_model) * w_itemsize
    resident_need = (2 * w_bytes
                     + 2 * tm * d_model * (x_itemsize + o_itemsize)
                     + tm * dff_128 * (4 + w_itemsize)      # f32 h + bf16 re-cast
                     + (dff_128 + d_model) * 4              # biases
                     )
    if weights_resident is None:
        weights_resident = resident_need <= int(0.8 * vmem_limit_bytes)

    b2_2d = b2.reshape(1, d_model).astype(jnp.float32)
    flops = 4 * M_pad * d_model * dff_128   # two matmuls, 2*M*N*K each

    if weights_resident:
        # ------------------------- RESIDENT PATH -------------------------
        dff_pad = dff_128
        if dff_pad != d_ff:
            # Zero padding is exact: relu(0+0)=0 and padded W2 rows are zero.
            w1 = jnp.pad(w1, ((0, 0), (0, dff_pad - d_ff)))
            b1 = jnp.pad(b1, ((0, dff_pad - d_ff),))
            w2 = jnp.pad(w2, ((0, dff_pad - d_ff), (0, 0)))
        b1_2d = b1.reshape(1, dff_pad).astype(jnp.float32)

        grid = (M_pad // tm,)
        bytes_accessed = (
            x2d.size * x_itemsize
            + w1.size * w_itemsize + w2.size * w_itemsize
            + b1_2d.size * 4 + b2_2d.size * 4
            + M_pad * d_model * o_itemsize)

        out = pl.pallas_call(
            ffn_resident_kernel,
            out_shape=jax.ShapeDtypeStruct((M_pad, d_model), out_dtype),
            grid_spec=pltpu.PrefetchScalarGridSpec(
                num_scalar_prefetch=0,
                grid=grid,
                in_specs=[
                    pl.BlockSpec((tm, d_model), lambda i: (i, 0)),       # x tile
                    pl.BlockSpec((d_model, dff_pad), lambda i: (0, 0)),  # W1 (resident)
                    pl.BlockSpec((1, dff_pad), lambda i: (0, 0)),        # b1 (resident)
                    pl.BlockSpec((dff_pad, d_model), lambda i: (0, 0)),  # W2 (resident)
                    pl.BlockSpec((1, d_model), lambda i: (0, 0)),        # b2 (resident)
                ],
                out_specs=pl.BlockSpec((tm, d_model), lambda i: (i, 0)),
            ),
            compiler_params=pltpu.CompilerParams(
                dimension_semantics=("parallel",),
                vmem_limit_bytes=vmem_limit_bytes,
            ),
            cost_estimate=pl.CostEstimate(
                flops=flops, transcendentals=0, bytes_accessed=bytes_accessed),
        )(x2d, w1, b1_2d, w2, b2_2d)

    else:
        # ------------------------- STREAMING PATH -------------------------
        tf = _round_up(max(128, tf), 128)
        tf = min(tf, dff_128)
        dff_pad = _round_up(d_ff, tf)
        if dff_pad != d_ff:
            w1 = jnp.pad(w1, ((0, 0), (0, dff_pad - d_ff)))
            b1 = jnp.pad(b1, ((0, dff_pad - d_ff),))
            w2 = jnp.pad(w2, ((0, dff_pad - d_ff), (0, 0)))
        b1_2d = b1.reshape(1, dff_pad).astype(jnp.float32)

        grid = (M_pad // tm, dff_pad // tf)
        n_token_tiles = grid[0]
        w_stream_bytes = (w1.size + w2.size) * w_itemsize + b1_2d.size * 4
        bytes_accessed = (
            x2d.size * x_itemsize
            + n_token_tiles * w_stream_bytes       # weights re-streamed per token tile
            + b2_2d.size * 4
            + M_pad * d_model * o_itemsize)

        out = pl.pallas_call(
            ffn_stream_kernel,
            out_shape=jax.ShapeDtypeStruct((M_pad, d_model), out_dtype),
            grid_spec=pltpu.PrefetchScalarGridSpec(
                num_scalar_prefetch=0,
                grid=grid,
                in_specs=[
                    pl.BlockSpec((tm, d_model), lambda i, f: (i, 0)),   # x tile
                    pl.BlockSpec((d_model, tf), lambda i, f: (0, f)),   # W1 chunk
                    pl.BlockSpec((1, tf), lambda i, f: (0, f)),         # b1 chunk
                    pl.BlockSpec((tf, d_model), lambda i, f: (f, 0)),   # W2 chunk
                    pl.BlockSpec((1, d_model), lambda i, f: (0, 0)),    # b2 (constant)
                ],
                out_specs=pl.BlockSpec((tm, d_model), lambda i, f: (i, 0)),
                scratch_shapes=[pltpu.VMEM((tm, d_model), jnp.float32)],
            ),
            compiler_params=pltpu.CompilerParams(
                dimension_semantics=("parallel", "arbitrary"),
                vmem_limit_bytes=vmem_limit_bytes,
            ),
            cost_estimate=pl.CostEstimate(
                flops=flops, transcendentals=0, bytes_accessed=bytes_accessed),
        )(x2d, w1, b1_2d, w2, b2_2d)

    if M_pad != M:
        out = out[:M]
    return out.reshape(orig_shape)


# ----------------------------------------------------------------------------
# Demo / self-test
# ----------------------------------------------------------------------------
if __name__ == "__main__":
    # Small shapes consistent with the module: batch=2, seq=16, d_model=128, d_ff=256.
    B, S, D_MODEL, D_FF = 2, 16, 128, 256

    key = jax.random.PRNGKey(0)
    kx, kw1, kb1, kw2, kb2 = jax.random.split(key, 5)

    # bf16 activations/weights (MXU-native), f32 biases.
    x = jax.random.normal(kx, (B, S, D_MODEL), dtype=jnp.float32).astype(jnp.bfloat16)
    w1 = (jax.random.normal(kw1, (D_MODEL, D_FF), dtype=jnp.float32)
          * (1.0 / (D_MODEL ** 0.5))).astype(jnp.bfloat16)
    b1 = jax.random.normal(kb1, (D_FF,), dtype=jnp.float32) * 0.01
    w2 = (jax.random.normal(kw2, (D_FF, D_MODEL), dtype=jnp.float32)
          * (1.0 / (D_FF ** 0.5))).astype(jnp.bfloat16)
    b2 = jax.random.normal(kb2, (D_MODEL,), dtype=jnp.float32) * 0.01

    # Reference with the same mixed precision (bf16 matmul inputs, f32 accumulate).
    h_ref = jnp.dot(x, w1, preferred_element_type=jnp.float32) + b1
    h_ref = jnp.maximum(h_ref, 0.0)
    ref = jnp.dot(h_ref.astype(jnp.bfloat16), w2,
                  preferred_element_type=jnp.float32) + b2

    # Path 1: auto (weights resident at these shapes) — single-axis grid.
    y_res = positionwise_feed_forward(x, w1, b1, w2, b2)
    y_res = jax.block_until_ready(y_res)
    assert y_res.shape == x.shape
    assert jnp.allclose(y_res.astype(jnp.float32), ref, atol=1e-2, rtol=1e-2), \
        "resident path mismatch vs reference"

    # Path 2: forced streaming with tiny tiles — exercises the 2-D grid,
    # f32 accumulator and the b2-folded init even at these small shapes.
    y_str = positionwise_feed_forward(x, w1, b1, w2, b2, tm=16, tf=128,
                                      weights_resident=False)
    y_str = jax.block_until_ready(y_str)
    assert y_str.shape == x.shape
    assert jnp.allclose(y_str.astype(jnp.float32), ref, atol=1e-2, rtol=1e-2), \
        "streaming path mismatch vs reference"

    print("KERNEL_OK")
</pallas_src>

<mosaic_0001>
module attributes {stable_mosaic.version = 11 : i64} {
  func.func @ffn_resident_kernel(%arg0: i32, %arg1: memref<32x128xbf16, #tpu.memory_space<vmem>>, %arg2: memref<128x256xbf16, #tpu.memory_space<vmem>>, %arg3: memref<1x256xf32, #tpu.memory_space<vmem>>, %arg4: memref<256x128xbf16, #tpu.memory_space<vmem>>, %arg5: memref<1x128xf32, #tpu.memory_space<vmem>>, %arg6: memref<32x128xbf16, #tpu.memory_space<vmem>>) attributes {dimension_semantics = [#tpu.dimension_semantics<parallel>], iteration_bounds = array<i64: 1>, scalar_prefetch = 0 : i64, scratch_operands = 0 : i64, tpu.core_type = #tpu.core_type<tc>, window_params = [{transform_indices = @transform_0, window_bounds = array<i64: 32, 128>}, {pipeline_mode = #tpu.pipeline_mode<synchronous>, transform_indices = @transform_1, window_bounds = array<i64: 128, 256>}, {pipeline_mode = #tpu.pipeline_mode<synchronous>, transform_indices = @transform_2, window_bounds = array<i64: 1, 256>}, {pipeline_mode = #tpu.pipeline_mode<synchronous>, transform_indices = @transform_3, window_bounds = array<i64: 256, 128>}, {pipeline_mode = #tpu.pipeline_mode<synchronous>, transform_indices = @transform_4, window_bounds = array<i64: 1, 128>}, {transform_indices = @transform_5, window_bounds = array<i64: 32, 128>}]} {
    %c0 = arith.constant 0 : index
    %c0_0 = arith.constant 0 : index
    %0 = vector.load %arg1[%c0, %c0_0] : memref<32x128xbf16, #tpu.memory_space<vmem>>, vector<32x128xbf16>
    %c0_1 = arith.constant 0 : index
    %c0_2 = arith.constant 0 : index
    %1 = vector.load %arg2[%c0_1, %c0_2] : memref<128x256xbf16, #tpu.memory_space<vmem>>, vector<128x256xbf16>
    %cst = arith.constant dense<0.000000e+00> : vector<32x256xf32>
    %2 = tpu.matmul %0, %1, %cst {dimension_numbers = #tpu.dot_dimension_numbers<[1], [0], [0], [1], [0, 0, 1, 1], [], []>} : vector<32x128xbf16>, vector<128x256xbf16>, vector<32x256xf32> -> vector<32x256xf32>
    %c0_3 = arith.constant 0 : index
    %c0_4 = arith.constant 0 : index
    %3 = vector.load %arg3[%c0_3, %c0_4] : memref<1x256xf32, #tpu.memory_space<vmem>>, vector<1x256xf32>
    %4 = vector.broadcast %3 : vector<1x256xf32> to vector<32x256xf32>
    %5 = arith.addf %2, %4 : vector<32x256xf32>
    %cst_5 = arith.constant 0.000000e+00 : f32
    %6 = vector.broadcast %cst_5 : f32 to vector<32x256xf32>
    %7 = arith.maximumf %5, %6 : vector<32x256xf32>
    %8 = arith.truncf %7 : vector<32x256xf32> to vector<32x256xbf16>
    %c0_6 = arith.constant 0 : index
    %c0_7 = arith.constant 0 : index
    %9 = vector.load %arg4[%c0_6, %c0_7] : memref<256x128xbf16, #tpu.memory_space<vmem>>, vector<256x128xbf16>
    %cst_8 = arith.constant dense<0.000000e+00> : vector<32x128xf32>
    %10 = tpu.matmul %8, %9, %cst_8 {dimension_numbers = #tpu.dot_dimension_numbers<[1], [0], [0], [1], [0, 0, 1, 1], [], []>} : vector<32x256xbf16>, vector<256x128xbf16>, vector<32x128xf32> -> vector<32x128xf32>
    %c0_9 = arith.constant 0 : index
    %c0_10 = arith.constant 0 : index
    %11 = vector.load %arg5[%c0_9, %c0_10] : memref<1x128xf32, #tpu.memory_space<vmem>>, vector<1x128xf32>
    %12 = vector.broadcast %11 : vector<1x128xf32> to vector<32x128xf32>
    %13 = arith.addf %10, %12 : vector<32x128xf32>
    %14 = arith.truncf %13 : vector<32x128xf32> to vector<32x128xbf16>
    %c0_11 = arith.constant 0 : index
    %c0_12 = arith.constant 0 : index
    %15 = vector.load %arg6[%c0_11, %c0_12] : memref<32x128xbf16, #tpu.memory_space<vmem>>, vector<32x128xbf16>
    tpu.vector_store %arg6[%c0_11, %c0_12], %14 {strides = array<i32>} : memref<32x128xbf16, #tpu.memory_space<vmem>>, vector<32x128xbf16>,
    return
  }
  func.func @transform_0(%arg0: i32) -> (i32, i32) {
    %c0_i32 = arith.constant 0 : i32
    %c0_i32_0 = arith.constant 0 : i32
    return %arg0, %c0_i32 : i32, i32
  }
  func.func @transform_1(%arg0: i32) -> (i32, i32) {
    %c0_i32 = arith.constant 0 : i32
    %c0_i32_0 = arith.constant 0 : i32
    %c0_i32_1 = arith.constant 0 : i32
    return %c0_i32, %c0_i32_0 : i32, i32
  }
  func.func @transform_2(%arg0: i32) -> (i32, i32) {
    %c0_i32 = arith.constant 0 : i32
    %c0_i32_0 = arith.constant 0 : i32
    %c0_i32_1 = arith.constant 0 : i32
    return %c0_i32, %c0_i32_0 : i32, i32
  }
  func.func @transform_3(%arg0: i32) -> (i32, i32) {
    %c0_i32 = arith.constant 0 : i32
    %c0_i32_0 = arith.constant 0 : i32
    %c0_i32_1 = arith.constant 0 : i32
    return %c0_i32, %c0_i32_0 : i32, i32
  }
  func.func @transform_4(%arg0: i32) -> (i32, i32) {
    %c0_i32 = arith.constant 0 : i32
    %c0_i32_0 = arith.constant 0 : i32
    %c0_i32_1 = arith.constant 0 : i32
    return %c0_i32, %c0_i32_0 : i32, i32
  }
  func.func @transform_5(%arg0: i32) -> (i32, i32) {
    %c0_i32 = arith.constant 0 : i32
    %c0_i32_0 = arith.constant 0 : i32
    return %arg0, %c0_i32 : i32, i32
  }
}

</mosaic_0001>

<llo_original>
// kernel: tpu_custom_call.1
$region0: #{tpu_custom_call.1}
  #allocation0 [shape = 'u32[]', space=smem, size = 0x4, offset = 0x4, fixed_abs, tag = 'smem constant byte address 0x4 - core index']
  #allocation1 [shape = 'u32[72,128]{1,0:T(1,128)}', space=vmem, size = 0x9000, scoped, tag = 'internal scratch']
  %s0 = inlined_call_operand.hbm [shape: bf16[32,128], index: 0, kind: input, shape index: {}]
  %s1 = inlined_call_operand.hbm [shape: bf16[128,256], index: 1, kind: input, shape index: {}]
  %s2 = inlined_call_operand.hbm [shape: f32[1,256], index: 2, kind: input, shape index: {}]
  %s3 = inlined_call_operand.hbm [shape: bf16[256,128], index: 3, kind: input, shape index: {}]
  %s4 = inlined_call_operand.vmem [shape: f32[1,128], index: 4, kind: input, shape index: {}]
  %s5 = inlined_call_operand.hbm [shape: bf16[32,128], index: 5, kind: output, shape index: {}]
  %s6 = sld [smem:[#allocation0]]
  $region46: #{tpu_custom_call.1} parent=0
    _
  %s8 = ssub.s32 1, %s6
  %s9 = scalar_select 0, %s8, %s6
  $region1: #{tpu_custom_call.1} parent=0
    #allocation2 [shape = 'u8[8192]{0}', space=vmem, size = 0x2000, scoped, tag = 'input window, operand 0, single buffered']
    #allocation3 [shape = 's32[1]{0}', space=sflag, size = 0x4, scoped, tag = 'scoped memory for tpu_custom_call.1']
    #allocation4 [shape = 's32[1]{0}', space=sflag, size = 0x4, scoped, tag = 'scoped memory for tpu_custom_call.1']
    #allocation5 [shape = 'u8[65536]{0}', space=vmem, size = 0x10000, scoped, tag = 'input window, operand 1, single buffered']
    #allocation6 [shape = 's32[1]{0}', space=sflag, size = 0x4, scoped, tag = 'scoped memory for tpu_custom_call.1']
    #allocation7 [shape = 'u8[1024]{0}', space=vmem, size = 0x400, scoped, tag = 'input window, operand 2, single buffered']
    #allocation8 [shape = 'u8[65536]{0}', space=vmem, size = 0x10000, scoped, tag = 'input window, operand 3, single buffered']
    #allocation9 [shape = 's32[1]{0}', space=sflag, size = 0x4, scoped, tag = 'scoped memory for tpu_custom_call.1']
    #allocation10 [shape = 'u8[8192]{0}', space=vmem, size = 0x2000, scoped, tag = 'output window, operand 0, single buffered']
    %10 = vsyncpa [#allocation3], 0
    %11 = vsyncpa [#allocation6], 0
    %12 = vsyncpa [#allocation9], 0
    %13 = vsyncpa [#allocation4], 0
    // Predicated region
    $region2: #{tpu_custom_call.1} parent=1 // pred_check
      _
    $region3: #{tpu_custom_call.1} parent=1 // pred_check_branch
      %15 = sbr.rel (0) target = $region5
    $region4: #{tpu_custom_call.1} parent=1 // pred_region
      %17 = vsyncadd [#allocation3], 0
      %s18 = sshll.u32 %s0, 4
      %s19 = int_to_ptr.hbm [resolvable:$true] %s18
      %s20 = sshll.u32 [#allocation2], 4
      %s21 = int_to_ptr.vmem [resolvable:$true] %s20
      %26 = dma.hbm_to_vmem [thread:$0]  %s19, 256, %s21, [#allocation3], 64, 64, 4
    $region5: #{tpu_custom_call.1} parent=1 // pred_fallthru
      _
    // Predicated region
    $region6: #{tpu_custom_call.1} parent=1 // pred_check
      _
    $region7: #{tpu_custom_call.1} parent=1 // pred_check_branch
      %28 = sbr.rel (0) target = $region9
    $region8: #{tpu_custom_call.1} parent=1 // pred_region
      %30 = vsyncadd [#allocation6], 0
      %s31 = sshll.u32 %s1, 4
      %s32 = int_to_ptr.hbm [resolvable:$true] %s31
      %s33 = sshll.u32 [#allocation5], 4
      %s34 = int_to_ptr.vmem [resolvable:$true] %s33
      %39 = dma.hbm_to_vmem [thread:$0]  %s32, 2048, %s34, [#allocation6], 128, 128, 8
    $region9: #{tpu_custom_call.1} parent=1 // pred_fallthru
      _
    // Predicated region
    $region10: #{tpu_custom_call.1} parent=1 // pred_check
      _
    $region11: #{tpu_custom_call.1} parent=1 // pred_check_branch
      %41 = sbr.rel (0) target = $region13
    $region12: #{tpu_custom_call.1} parent=1 // pred_region
      %43 = vsyncadd [#allocation6], 0
      %s45 = sshll.u32 %s2, 4
      %s46 = int_to_ptr.hbm [resolvable:$true] %s45
      %s47 = sshll.u32 [#allocation7], 4
      %s48 = int_to_ptr.vmem [resolvable:$true] %s47
      %50 = dma.hbm_to_vmem [thread:$0]  %s46, 32, %s48, [#allocation6]
    $region13: #{tpu_custom_call.1} parent=1 // pred_fallthru
      _
    // Predicated region
    $region14: #{tpu_custom_call.1} parent=1 // pred_check
      _
    $region15: #{tpu_custom_call.1} parent=1 // pred_check_branch
      %52 = sbr.rel (0) target = $region17
    $region16: #{tpu_custom_call.1} parent=1 // pred_region
      %54 = vsyncadd [#allocation9], 0
      %s55 = sshll.u32 %s3, 4
      %s56 = int_to_ptr.hbm [resolvable:$true] %s55
      %s57 = sshll.u32 [#allocation8], 4
      %s58 = int_to_ptr.vmem [resolvable:$true] %s57
      %63 = dma.hbm_to_vmem [thread:$0]  %s56, 2048, %s58, [#allocation9], 64, 64, 4
    $region17: #{tpu_custom_call.1} parent=1 // pred_fallthru
      _
    // Predicated region
    $region18: #{tpu_custom_call.1} parent=1 // pred_check
      _
    $region19: #{tpu_custom_call.1} parent=1 // pred_check_branch
      %65 = sbr.rel (0) target = $region21
    $region20: #{tpu_custom_call.1} parent=1 // pred_region
      _
    $region21: #{tpu_custom_call.1} parent=1 // pred_fallthru
      _
    // Predicated region
    $region22: #{tpu_custom_call.1} parent=1 // pred_check
      _
    $region23: #{tpu_custom_call.1} parent=1 // pred_check_branch
      %67 = sbr.rel (0) target = $region25
    $region24: #{tpu_custom_call.1} parent=1 // pred_region
      %69 = dma.done [#allocation3], 256
    $region25: #{tpu_custom_call.1} parent=1 // pred_fallthru
      _
    // Predicated region
    $region26: #{tpu_custom_call.1} parent=1 // pred_check
      _
    $region27: #{tpu_custom_call.1} parent=1 // pred_check_branch
      %71 = sbr.rel (0) target = $region29
    $region28: #{tpu_custom_call.1} parent=1 // pred_region
      %73 = dma.done [#allocation6], 2048
    $region29: #{tpu_custom_call.1} parent=1 // pred_fallthru
      _
    // Predicated region
    $region30: #{tpu_custom_call.1} parent=1 // pred_check
      _
    $region31: #{tpu_custom_call.1} parent=1 // pred_check_branch
      %75 = sbr.rel (0) target = $region33
    $region32: #{tpu_custom_call.1} parent=1 // pred_region
      %77 = dma.done [#allocation6], 32
    $region33: #{tpu_custom_call.1} parent=1 // pred_fallthru
      _
    // Predicated region
    $region34: #{tpu_custom_call.1} parent=1 // pred_check
      _
    $region35: #{tpu_custom_call.1} parent=1 // pred_check_branch
      %79 = sbr.rel (0) target = $region37
    $region36: #{tpu_custom_call.1} parent=1 // pred_region
      %81 = dma.done [#allocation9], 2048
    $region37: #{tpu_custom_call.1} parent=1 // pred_fallthru
      _
    %v82 = vld [vmem:[#allocation2] sm:$0xf]
    %v83 = vld [vmem:[#allocation2 + $0x4] sm:$0xf]
    %v84 = vld [vmem:[#allocation2 + $0x8] sm:$0xf]
    %v85 = vld [vmem:[#allocation2 + $0xc] sm:$0xf]
    %v86 = vld [vmem:[#allocation5] sm:$0xff]
    %v87 = vld [vmem:[#allocation5 + $0x8] sm:$0xff]
    %v88 = vld [vmem:[#allocation5 + $0x10] sm:$0xff]
    %v89 = vld [vmem:[#allocation5 + $0x18] sm:$0xff]
    %v90 = vld [vmem:[#allocation5 + $0x20] sm:$0xff]
    %v91 = vld [vmem:[#allocation5 + $0x28] sm:$0xff]
    %v92 = vld [vmem:[#allocation5 + $0x30] sm:$0xff]
    %v93 = vld [vmem:[#allocation5 + $0x38] sm:$0xff]
    %v94 = vld [vmem:[#allocation5 + $0x40] sm:$0xff]
    %v95 = vld [vmem:[#allocation5 + $0x48] sm:$0xff]
    %v96 = vld [vmem:[#allocation5 + $0x50] sm:$0xff]
    %v97 = vld [vmem:[#allocation5 + $0x58] sm:$0xff]
    %v98 = vld [vmem:[#allocation5 + $0x60] sm:$0xff]
    %v99 = vld [vmem:[#allocation5 + $0x68] sm:$0xff]
    %v100 = vld [vmem:[#allocation5 + $0x70] sm:$0xff]
    %v101 = vld [vmem:[#allocation5 + $0x78] sm:$0xff]
    %v102 = vld [vmem:[#allocation7] sm:$0x3]
    %v104 = vperm.slane %v102, 0
    %v105 = vperm.slane %v102, 1
    %v112 = vunpack.c.l.b16 %v82
    %v113 = vunpack.c.l.b16 %v83
    %v114 = vunpack.c.l.b16 %v84
    %v115 = vunpack.c.l.b16 %v85
    %v116 = vpack.c.b16 %v113, %v112
    %v117 = vpack.c.b16 %v115, %v114
    %v136 = vunpack.c.l.b16 %v86
    %v137 = vunpack.c.h.b16 %v86
    %v138 = vunpack.c.l.b16 %v87
    %v139 = vunpack.c.h.b16 %v87
    %v140 = vunpack.c.l.b16 %v88
    %v141 = vunpack.c.h.b16 %v88
    %v142 = vunpack.c.l.b16 %v89
    %v143 = vunpack.c.h.b16 %v89
    %v144 = vunpack.c.l.b16 %v90
    %v145 = vunpack.c.h.b16 %v90
    %v146 = vunpack.c.l.b16 %v91
    %v147 = vunpack.c.h.b16 %v91
    %v148 = vunpack.c.l.b16 %v92
    %v149 = vunpack.c.h.b16 %v92
    %v150 = vunpack.c.l.b16 %v93
    %v151 = vunpack.c.h.b16 %v93
    %v152 = vunpack.c.l.b16 %v94
    %v153 = vunpack.c.h.b16 %v94
    %v154 = vunpack.c.l.b16 %v95
    %v155 = vunpack.c.h.b16 %v95
    %v156 = vunpack.c.l.b16 %v96
    %v157 = vunpack.c.h.b16 %v96
    %v158 = vunpack.c.l.b16 %v97
    %v159 = vunpack.c.h.b16 %v97
    %v160 = vunpack.c.l.b16 %v98
    %v161 = vunpack.c.h.b16 %v98
    %v162 = vunpack.c.l.b16 %v99
    %v163 = vunpack.c.h.b16 %v99
    %v164 = vunpack.c.l.b16 %v100
    %v165 = vunpack.c.h.b16 %v100
    %v166 = vunpack.c.l.b16 %v101
    %v167 = vunpack.c.h.b16 %v101
    %v168 = vpack.c.b16 %v138, %v136
    %v169 = vpack.c.b16 %v139, %v137
    %v170 = vpack.c.b16 %v142, %v140
    %v171 = vpack.c.b16 %v143, %v141
    %v172 = vpack.c.b16 %v146, %v144
    %v173 = vpack.c.b16 %v147, %v145
    %v174 = vpack.c.b16 %v150, %v148
    %v175 = vpack.c.b16 %v151, %v149
    %v176 = vpack.c.b16 %v154, %v152
    %v177 = vpack.c.b16 %v155, %v153
    %v178 = vpack.c.b16 %v158, %v156
    %v179 = vpack.c.b16 %v159, %v157
    %v180 = vpack.c.b16 %v162, %v160
    %v181 = vpack.c.b16 %v163, %v161
    %v182 = vpack.c.b16 %v166, %v164
    %v183 = vpack.c.b16 %v167, %v165
    %200 = vmatpush.bf16.msra.mxu0 %v182
    %201 = vmatpush.bf16.msra.mxu0 %v180
    %202 = vmatpush.bf16.msra.mxu0 %v178
    %203 = vmatpush.bf16.msra.mxu0 %v176
    %204 = vmatpush.bf16.msra.mxu0 %v174
    %205 = vmatpush.bf16.msra.mxu0 %v172
    %206 = vmatpush.bf16.msra.mxu0 %v170
    %207 = vmatpush.bf16.msra.mxu0 %v168
    %208 = vmatmul.bf16.gmra.mxu0 %v116
    %v209 = vpop.f32.mrf.mxu0
    %v210 = vadd.f32 %v104, %v209
    %v211 = vpop.f32.mrf.mxu0
    %v212 = vadd.f32 %v104, %v211
    %213 = vmatmul.bf16.gmra.mxu0 %v117
    %v214 = vpop.f32.mrf.mxu0
    %v215 = vadd.f32 %v104, %v214
    %v216 = vpop.f32.mrf.mxu0
    %v217 = vadd.f32 %v104, %v216
    %218 = vdwg.mxu0
    %219 = vmatpush.bf16.msra.mxu0 %v183
    %220 = vmatpush.bf16.msra.mxu0 %v181
    %221 = vmatpush.bf16.msra.mxu0 %v179
    %222 = vmatpush.bf16.msra.mxu0 %v177
    %223 = vmatpush.bf16.msra.mxu0 %v175
    %224 = vmatpush.bf16.msra.mxu0 %v173
    %225 = vmatpush.bf16.msra.mxu0 %v171
    %226 = vmatpush.bf16.msra.mxu0 %v169
    %227 = vmatmul.bf16.gmra.mxu0 %v116
    %v228 = vpop.f32.mrf.mxu0
    %v229 = vadd.f32 %v105, %v228
    %v230 = vpop.f32.mrf.mxu0
    %v231 = vadd.f32 %v105, %v230
    %232 = vmatmul.bf16.gmra.mxu0 %v117
    %v233 = vpop.f32.mrf.mxu0
    %v234 = vadd.f32 %v105, %v233
    %v235 = vpop.f32.mrf.mxu0
    %v236 = vadd.f32 %v105, %v235
    %237 = vdwg.mxu0
    %v238 = vmax.f32 %v210, 0.0
    %v239 = vmax.f32 %v229, 0.0
    %v240 = vmax.f32 %v212, 0.0
    %v241 = vmax.f32 %v231, 0.0
    %v242 = vmax.f32 %v215, 0.0
    %v243 = vmax.f32 %v234, 0.0
    %v244 = vmax.f32 %v217, 0.0
    %v245 = vmax.f32 %v236, 0.0
    %v246 = vpack.c.bf16 %v240, %v238
    %v247 = vpack.c.bf16 %v241, %v239
    %v248 = vpack.c.bf16 %v244, %v242
    %v249 = vpack.c.bf16 %v245, %v243
    %v250 = vld [vmem:[#allocation8] sm:$0xf]
    %v251 = vld [vmem:[#allocation8 + $0x4] sm:$0xf]
    %v252 = vld [vmem:[#allocation8 + $0x8] sm:$0xf]
    %v253 = vld [vmem:[#allocation8 + $0xc] sm:$0xf]
    %v254 = vld [vmem:[#allocation8 + $0x10] sm:$0xf]
    %v255 = vld [vmem:[#allocation8 + $0x14] sm:$0xf]
    %v256 = vld [vmem:[#allocation8 + $0x18] sm:$0xf]
    %v257 = vld [vmem:[#allocation8 + $0x1c] sm:$0xf]
    %v258 = vld [vmem:[#allocation8 + $0x20] sm:$0xf]
    %v259 = vld [vmem:[#allocation8 + $0x24] sm:$0xf]
    %v260 = vld [vmem:[#allocation8 + $0x28] sm:$0xf]
    %v261 = vld [vmem:[#allocation8 + $0x2c] sm:$0xf]
    %v262 = vld [vmem:[#allocation8 + $0x30] sm:$0xf]
    %v263 = vld [vmem:[#allocation8 + $0x34] sm:$0xf]
    %v264 = vld [vmem:[#allocation8 + $0x38] sm:$0xf]
    %v265 = vld [vmem:[#allocation8 + $0x3c] sm:$0xf]
    %v266 = vld [vmem:[#allocation8 + $0x40] sm:$0xf]
    %v267 = vld [vmem:[#allocation8 + $0x44] sm:$0xf]
    %v268 = vld [vmem:[#allocation8 + $0x48] sm:$0xf]
    %v269 = vld [vmem:[#allocation8 + $0x4c] sm:$0xf]
    %v270 = vld [vmem:[#allocation8 + $0x50] sm:$0xf]
    %v271 = vld [vmem:[#allocation8 + $0x54] sm:$0xf]
    %v272 = vld [vmem:[#allocation8 + $0x58] sm:$0xf]
    %v273 = vld [vmem:[#allocation8 + $0x5c] sm:$0xf]
    %v274 = vld [vmem:[#allocation8 + $0x60] sm:$0xf]
    %v275 = vld [vmem:[#allocation8 + $0x64] sm:$0xf]
    %v276 = vld [vmem:[#allocation8 + $0x68] sm:$0xf]
    %v277 = vld [vmem:[#allocation8 + $0x6c] sm:$0xf]
    %v278 = vld [vmem:[#allocation8 + $0x70] sm:$0xf]
    %v279 = vld [vmem:[#allocation8 + $0x74] sm:$0xf]
    %v280 = vld [vmem:[#allocation8 + $0x78] sm:$0xf]
    %v281 = vld [vmem:[#allocation8 + $0x7c] sm:$0xf]
    %v282 = vld [vmem:[%s4] sm:$0x1]
    %v284 = vperm.slane %v282, 0
    %v318 = vunpack.c.l.b16 %v250
    %v319 = vunpack.c.l.b16 %v251
    %v320 = vunpack.c.l.b16 %v252
    %v321 = vunpack.c.l.b16 %v253
    %v322 = vunpack.c.l.b16 %v254
    %v323 = vunpack.c.l.b16 %v255
    %v324 = vunpack.c.l.b16 %v256
    %v325 = vunpack.c.l.b16 %v257
    %v326 = vunpack.c.l.b16 %v258
    %v327 = vunpack.c.l.b16 %v259
    %v328 = vunpack.c.l.b16 %v260
    %v329 = vunpack.c.l.b16 %v261
    %v330 = vunpack.c.l.b16 %v262
    %v331 = vunpack.c.l.b16 %v263
    %v332 = vunpack.c.l.b16 %v264
    %v333 = vunpack.c.l.b16 %v265
    %v334 = vunpack.c.l.b16 %v266
    %v335 = vunpack.c.l.b16 %v267
    %v336 = vunpack.c.l.b16 %v268
    %v337 = vunpack.c.l.b16 %v269
    %v338 = vunpack.c.l.b16 %v270
    %v339 = vunpack.c.l.b16 %v271
    %v340 = vunpack.c.l.b16 %v272
    %v341 = vunpack.c.l.b16 %v273
    %v342 = vunpack.c.l.b16 %v274
    %v343 = vunpack.c.l.b16 %v275
    %v344 = vunpack.c.l.b16 %v276
    %v345 = vunpack.c.l.b16 %v277
    %v346 = vunpack.c.l.b16 %v278
    %v347 = vunpack.c.l.b16 %v279
    %v348 = vunpack.c.l.b16 %v280
    %v349 = vunpack.c.l.b16 %v281
    %v350 = vpack.c.b16 %v319, %v318
    %v351 = vpack.c.b16 %v321, %v320
    %v352 = vpack.c.b16 %v323, %v322
    %v353 = vpack.c.b16 %v325, %v324
    %v354 = vpack.c.b16 %v327, %v326
    %v355 = vpack.c.b16 %v329, %v328
    %v356 = vpack.c.b16 %v331, %v330
    %v357 = vpack.c.b16 %v333, %v332
    %v358 = vpack.c.b16 %v335, %v334
    %v359 = vpack.c.b16 %v337, %v336
    %v360 = vpack.c.b16 %v339, %v338
    %v361 = vpack.c.b16 %v341, %v340
    %v362 = vpack.c.b16 %v343, %v342
    %v363 = vpack.c.b16 %v345, %v344
    %v364 = vpack.c.b16 %v347, %v346
    %v365 = vpack.c.b16 %v349, %v348
    %382 = vmatpush.bf16.msra.mxu0 %v357
    %383 = vmatpush.bf16.msra.mxu0 %v356
    %384 = vmatpush.bf16.msra.mxu0 %v355
    %385 = vmatpush.bf16.msra.mxu0 %v354
    %386 = vmatpush.bf16.msra.mxu0 %v353
    %387 = vmatpush.bf16.msra.mxu0 %v352
    %388 = vmatpush.bf16.msra.mxu0 %v351
    %389 = vmatpush.bf16.msra.mxu0 %v350
    %390 = vmatmul.bf16.gmra.mxu0 %v246
    %v391 = vpop.f32.mrf.mxu0
    %v392 = vadd.f32 %v284, %v391
    %v393 = vpop.f32.mrf.mxu0
    %v394 = vadd.f32 %v284, %v393
    %395 = vmatmul.bf16.gmra.mxu0 %v248
    %v396 = vpop.f32.mrf.mxu0
    %v397 = vadd.f32 %v284, %v396
    %v398 = vpop.f32.mrf.mxu0
    %v399 = vadd.f32 %v284, %v398
    %400 = vdwg.mxu0
    %401 = vmatpush.bf16.msra.mxu0 %v365
    %402 = vmatpush.bf16.msra.mxu0 %v364
    %403 = vmatpush.bf16.msra.mxu0 %v363
    %404 = vmatpush.bf16.msra.mxu0 %v362
    %405 = vmatpush.bf16.msra.mxu0 %v361
    %406 = vmatpush.bf16.msra.mxu0 %v360
    %407 = vmatpush.bf16.msra.mxu0 %v359
    %408 = vmatpush.bf16.msra.mxu0 %v358
    %409 = vmatmul.bf16.gmra.mxu0 %v247
    %v410 = vpop.f32.mrf.mxu0
    %v411 = vadd.f32 %v392, %v410
    %v412 = vpop.f32.mrf.mxu0
    %v413 = vadd.f32 %v394, %v412
    %414 = vmatmul.bf16.gmra.mxu0 %v249
    %v415 = vpop.f32.mrf.mxu0
    %v416 = vadd.f32 %v397, %v415
    %v417 = vpop.f32.mrf.mxu0
    %v418 = vadd.f32 %v399, %v417
    %419 = vdwg.mxu0
    %v420 = vpack.c.bf16 %v411, %v411
    %v421 = vpack.c.bf16 %v413, %v413
    %v422 = vpack.c.bf16 %v416, %v416
    %v423 = vpack.c.bf16 %v418, %v418
    %424 = vst [vmem:[#allocation10] sm:$0xf] %v420
    %425 = vst [vmem:[#allocation10 + $0x4] sm:$0xf] %v421
    %426 = vst [vmem:[#allocation10 + $0x8] sm:$0xf] %v422
    %427 = vst [vmem:[#allocation10 + $0xc] sm:$0xf] %v423
    // Predicated region
    $region38: #{tpu_custom_call.1} parent=1 // pred_check
      _
    $region39: #{tpu_custom_call.1} parent=1 // pred_check_branch
      %429 = sbr.rel (0) target = $region41
    $region40: #{tpu_custom_call.1} parent=1 // pred_region
      %431 = vsyncadd [#allocation4], 0
      %s432 = sshll.u32 [#allocation10], 4
      %s433 = int_to_ptr.vmem [resolvable:$true] %s432
      %s434 = sshll.u32 %s5, 4
      %s435 = int_to_ptr.hbm [resolvable:$true] %s434
      %440 = dma.vmem_to_hbm [thread:$0]  %s433, 256, %s435, [#allocation4], 64, 64, 4
    $region41: #{tpu_custom_call.1} parent=1 // pred_fallthru
      _
    // Predicated region
    $region42: #{tpu_custom_call.1} parent=1 // pred_check
      _
    $region43: #{tpu_custom_call.1} parent=1 // pred_check_branch
      %442 = sbr.rel (0) target = $region45
    $region44: #{tpu_custom_call.1} parent=1 // pred_region
      %444 = dma.done [#allocation4], 256
    $region45: #{tpu_custom_call.1} parent=1 // pred_fallthru
      _
    %445 = vsyncpa [#allocation3], 1
    %446 = vsyncpa [#allocation6], 1
    %447 = vsyncpa [#allocation9], 1
    %448 = vsyncpa [#allocation4], 1

</llo_original>
